<compile_context>
chip_gen: v7x
topology: tpu7x:2x2x1
jax: 0.10.0
libtpu: 0.0.40
codegen_flags: <defaults>
</compile_context>

<pallas_src>
import functools

import jax
import jax.numpy as jnp
from jax.experimental import pallas as pl
from jax.experimental.pallas import tpu as pltpu

BN_EPS = 1e-5
LEAKY_SLOPE = 0.3
_LANE = 128
_MAX_BLOCK_M = 512


def _round_up(n, m):
    return ((n + m - 1) // m) * m


def _choose_block_m(batch):
    """Large batch tile (amortize ~0.35us/step, fill MXU M), grid >= 2 if possible."""
    if batch <= 8:
        return 8
    n_tiles = max(2, -(-batch // _MAX_BLOCK_M))
    return _round_up(-(-batch // n_tiles), 8)


def _encoder_kernel(x_ref, w01_ref, b1_ref, wh_ref, bh_ref, out_ref,
                    *, mm_precision):
    # Hidden layer: fused (L0 @ L1) linear with BN folded in as a per-column
    # affine, then LeakyReLU(0.3).  Epilogue stays in f32 (v5e VPU has no bf16).
    h = jnp.dot(x_ref[...], w01_ref[...],
                preferred_element_type=jnp.float32,
                precision=mm_precision)
    h = h + b1_ref[...]                              # (block_m, h1), f32
    h = jnp.where(h >= 0, h, LEAKY_SLOPE * h)

    # Fused mean/log_var heads: one lane-dense matmul of width zp (>=128),
    # single unmasked output store.
    out = jnp.dot(h.astype(wh_ref.dtype), wh_ref[...],
                  preferred_element_type=jnp.float32,
                  precision=mm_precision) + bh_ref[...]
    out_ref[...] = out.astype(out_ref.dtype)


@functools.partial(jax.jit, static_argnames=("weight_dtype",))
def encoder_forward(x, params, weight_dtype=jnp.float32):
    """Encoder forward pass as a single fused Pallas kernel.

    x: (B, x_dim) float32.
    params: dict of weights; Linear weights stored pre-transposed as (in, out).
    weight_dtype: matmul operand dtype (f32 or bf16); accumulation is f32.
    Returns (mean, log_var), each (B, z_dim) float32.
    """
    B, x_dim = x.shape
    h1 = params["w1"].shape[1]
    z = params["wm"].shape[1]
    f32 = jnp.float32
    hi = jax.lax.Precision.HIGHEST

    # ---- fold eval-mode BatchNorm into L1, then pre-multiply L0 @ L1 ----
    scale = params["gamma"] * jax.lax.rsqrt(params["running_var"] + BN_EPS)  # (1, h1)
    w1_f = params["w1"].astype(f32) * scale                                  # (h0, h1)
    b1_f = (params["beta"] - params["running_mean"] * scale).astype(f32)     # (1, h1)
    w01 = jnp.dot(params["w0"].astype(f32), w1_f, precision=hi)              # (x_dim, h1)

    # ---- fuse the two heads; zero-pad width to a multiple of 128 lanes ----
    zp = _round_up(max(2 * z, _LANE), _LANE)
    wh = jnp.zeros((h1, zp), f32)
    wh = wh.at[:, :z].set(params["wm"]).at[:, z:2 * z].set(params["wv"])
    bh = jnp.zeros((1, zp), f32)
    bh = bh.at[:, :z].set(params["bm"]).at[:, z:2 * z].set(params["bv"])

    # Matmul operand dtype (bf16 halves HBM traffic / VMEM residency).
    w01 = w01.astype(weight_dtype)
    wh = wh.astype(weight_dtype)
    x_in = x.astype(weight_dtype)
    mm_precision = hi if jnp.dtype(weight_dtype) == jnp.float32 else None

    # ---- batch tiling ----
    block_m = _choose_block_m(B)
    B_pad = _round_up(B, block_m)
    if B_pad != B:
        x_in = jnp.pad(x_in, ((0, B_pad - B), (0, 0)))
    grid = (B_pad // block_m,)

    def full_block(arr):  # whole weight array resident, same block every step
        return pl.BlockSpec(arr.shape, lambda i: (0, 0))

    in_specs = [
        pl.BlockSpec((block_m, x_dim), lambda i: (i, 0)),   # x  (batch tiled)
        full_block(w01),                                    # fused weights
        full_block(b1_f),                                   # folded BN bias
        full_block(wh),                                     # fused heads weight
        full_block(bh),                                     # fused heads bias
    ]
    out_specs = pl.BlockSpec((block_m, zp), lambda i: (i, 0))

    # ---- VMEM budget / cost estimate ----
    w_item = jnp.dtype(weight_dtype).itemsize
    tile_bytes = 2 * (block_m * x_dim * w_item + block_m * zp * 4)   # 2x-buffered tiles
    weight_bytes = 2 * (int(w01.size) * w_item + int(wh.size) * w_item
                        + (int(b1_f.size) + int(bh.size)) * 4)
    vmem_limit = int(min(max(tile_bytes + weight_bytes + (4 << 20), 16 << 20),
                         56 << 20))                                  # fits v7x 64 MiB
    flops = 2 * B_pad * (x_dim * h1 + h1 * zp)
    bytes_accessed = (B_pad * x_dim * w_item + int(w01.size) * w_item
                      + int(wh.size) * w_item
                      + (int(b1_f.size) + int(bh.size)) * 4
                      + B_pad * zp * 4)

    out = pl.pallas_call(
        functools.partial(_encoder_kernel, mm_precision=mm_precision),
        out_shape=jax.ShapeDtypeStruct((B_pad, zp), jnp.float32),
        grid_spec=pltpu.PrefetchScalarGridSpec(
            num_scalar_prefetch=0,
            grid=grid,
            in_specs=in_specs,
            out_specs=out_specs,
        ),
        compiler_params=pltpu.CompilerParams(
            dimension_semantics=("parallel",),
            vmem_limit_bytes=vmem_limit,
        ),
        cost_estimate=pl.CostEstimate(
            flops=int(flops), transcendentals=0,
            bytes_accessed=int(bytes_accessed)),
    )(x_in, w01, b1_f, wh, bh)

    mean = out[:B, :z]
    log_var = out[:B, z:2 * z]
    return mean, log_var


def init_params(key, x_dim, h0, h1, z):
    """Deterministic synthetic parameter init (shapes match the nn.Module)."""
    ks = jax.random.split(key, 8)
    scale = 0.05
    return {
        # Linear weights stored transposed: (in, out)
        "w0": scale * jax.random.normal(ks[0], (x_dim, h0), jnp.float32),
        "w1": scale * jax.random.normal(ks[1], (h0, h1), jnp.float32),
        # BatchNorm1d(h1) parameters / running stats (kept 2D (1, h1) for TPU)
        "gamma": 1.0 + 0.1 * jax.random.normal(ks[2], (1, h1), jnp.float32),
        "beta": 0.1 * jax.random.normal(ks[3], (1, h1), jnp.float32),
        "running_mean": 0.1 * jax.random.normal(ks[4], (1, h1), jnp.float32),
        "running_var": jnp.abs(1.0 + 0.1 * jax.random.normal(ks[5], (1, h1),
                                                             jnp.float32)),
        # mean / log_var heads (with bias)
        "wm": scale * jax.random.normal(ks[6], (h1, z), jnp.float32),
        "bm": 0.01 * jnp.arange(z, dtype=jnp.float32).reshape(1, z),
        "wv": scale * jax.random.normal(ks[7], (h1, z), jnp.float32),
        "bv": -0.01 * jnp.arange(z, dtype=jnp.float32).reshape(1, z),
    }


def encoder_reference(x, p):
    """Pure-JAX reference of the same eval-mode forward pass."""
    hi = jax.lax.Precision.HIGHEST
    h = jnp.dot(x, p["w0"], precision=hi)
    h = jnp.dot(h, p["w1"], precision=hi)
    h = (h - p["running_mean"]) / jnp.sqrt(p["running_var"] + BN_EPS)
    h = h * p["gamma"] + p["beta"]
    h = jnp.where(h >= 0, h, LEAKY_SLOPE * h)
    mean = jnp.dot(h, p["wm"], precision=hi) + p["bm"]
    log_var = jnp.dot(h, p["wv"], precision=hi) + p["bv"]
    return mean, log_var


if __name__ == "__main__":
    # Small shapes: x_dimension=32, layer_sizes=[32, 16, 16], z_dimension=8.
    B, X_DIM, H0, H1, Z = 16, 32, 16, 16, 8

    key = jax.random.PRNGKey(0)
    kx, kp = jax.random.split(key)
    x = jax.random.normal(kx, (B, X_DIM), jnp.float32)
    params = init_params(kp, X_DIM, H0, H1, Z)

    ref_mean, ref_logvar = encoder_reference(x, params)

    # f32 path (BN folding + W0@W1 pre-multiply change rounding slightly).
    mean, log_var = encoder_forward(x, params)
    jax.block_until_ready((mean, log_var))
    assert mean.shape == (B, Z) and log_var.shape == (B, Z)
    assert jnp.allclose(mean, ref_mean, atol=3e-3, rtol=3e-3)
    assert jnp.allclose(log_var, ref_logvar, atol=3e-3, rtol=3e-3)

    # bf16 weights/activations path (f32 accumulation; halves HBM traffic).
    mean_bf, logvar_bf = encoder_forward(x, params, weight_dtype=jnp.bfloat16)
    jax.block_until_ready((mean_bf, logvar_bf))
    assert jnp.allclose(mean_bf, ref_mean, atol=3e-2, rtol=3e-2)
    assert jnp.allclose(logvar_bf, ref_logvar, atol=3e-2, rtol=3e-2)

    print("KERNEL_OK")
</pallas_src>

<mosaic_0001>
module attributes {stable_mosaic.version = 11 : i64} {
  func.func @_encoder_kernel(%arg0: i32, %arg1: memref<8x32xf32, #tpu.memory_space<vmem>>, %arg2: memref<32x16xf32, #tpu.memory_space<vmem>>, %arg3: memref<1x16xf32, #tpu.memory_space<vmem>>, %arg4: memref<16x128xf32, #tpu.memory_space<vmem>>, %arg5: memref<1x128xf32, #tpu.memory_space<vmem>>, %arg6: memref<8x128xf32, #tpu.memory_space<vmem>>) attributes {dimension_semantics = [#tpu.dimension_semantics<parallel>], iteration_bounds = array<i64: 2>, scalar_prefetch = 0 : i64, scratch_operands = 0 : i64, tpu.core_type = #tpu.core_type<tc>, window_params = [{transform_indices = @transform_0, window_bounds = array<i64: 8, 32>}, {pipeline_mode = #tpu.pipeline_mode<synchronous>, transform_indices = @transform_1, window_bounds = array<i64: 32, 16>}, {pipeline_mode = #tpu.pipeline_mode<synchronous>, transform_indices = @transform_2, window_bounds = array<i64: 1, 16>}, {pipeline_mode = #tpu.pipeline_mode<synchronous>, transform_indices = @transform_3, window_bounds = array<i64: 16, 128>}, {pipeline_mode = #tpu.pipeline_mode<synchronous>, transform_indices = @transform_4, window_bounds = array<i64: 1, 128>}, {transform_indices = @transform_5, window_bounds = array<i64: 8, 128>}]} {
    %c0 = arith.constant 0 : index
    %c0_0 = arith.constant 0 : index
    %0 = vector.load %arg1[%c0, %c0_0] : memref<8x32xf32, #tpu.memory_space<vmem>>, vector<8x32xf32>
    %c0_1 = arith.constant 0 : index
    %c0_2 = arith.constant 0 : index
    %1 = vector.load %arg2[%c0_1, %c0_2] : memref<32x16xf32, #tpu.memory_space<vmem>>, vector<32x16xf32>
    %cst = arith.constant dense<0.000000e+00> : vector<8x16xf32>
    %2 = tpu.matmul %0, %1, %cst {dimension_numbers = #tpu.dot_dimension_numbers<[1], [0], [0], [1], [0, 0, 1, 1], [], []>, precision = #tpu.contract_precision<fp32>} : vector<8x32xf32>, vector<32x16xf32>, vector<8x16xf32> -> vector<8x16xf32>
    %c0_3 = arith.constant 0 : index
    %c0_4 = arith.constant 0 : index
    %3 = vector.load %arg3[%c0_3, %c0_4] : memref<1x16xf32, #tpu.memory_space<vmem>>, vector<1x16xf32>
    %4 = vector.broadcast %3 : vector<1x16xf32> to vector<8x16xf32>
    %5 = arith.addf %2, %4 : vector<8x16xf32>
    %cst_5 = arith.constant 0.000000e+00 : f32
    %6 = vector.broadcast %cst_5 : f32 to vector<8x16xf32>
    %7 = arith.cmpf oge, %5, %6 : vector<8x16xf32>
    %cst_6 = arith.constant 3.000000e-01 : f32
    %8 = vector.broadcast %cst_6 : f32 to vector<8x16xf32>
    %9 = arith.mulf %8, %5 : vector<8x16xf32>
    %10 = arith.select %7, %5, %9 : vector<8x16xi1>, vector<8x16xf32>
    %c0_7 = arith.constant 0 : index
    %c0_8 = arith.constant 0 : index
    %11 = vector.load %arg4[%c0_7, %c0_8] : memref<16x128xf32, #tpu.memory_space<vmem>>, vector<16x128xf32>
    %cst_9 = arith.constant dense<0.000000e+00> : vector<8x128xf32>
    %12 = tpu.matmul %10, %11, %cst_9 {dimension_numbers = #tpu.dot_dimension_numbers<[1], [0], [0], [1], [0, 0, 1, 1], [], []>, precision = #tpu.contract_precision<fp32>} : vector<8x16xf32>, vector<16x128xf32>, vector<8x128xf32> -> vector<8x128xf32>
    %c0_10 = arith.constant 0 : index
    %c0_11 = arith.constant 0 : index
    %13 = vector.load %arg5[%c0_10, %c0_11] : memref<1x128xf32, #tpu.memory_space<vmem>>, vector<1x128xf32>
    %14 = vector.broadcast %13 : vector<1x128xf32> to vector<8x128xf32>
    %15 = arith.addf %12, %14 : vector<8x128xf32>
    %c0_12 = arith.constant 0 : index
    %c0_13 = arith.constant 0 : index
    %16 = vector.load %arg6[%c0_12, %c0_13] : memref<8x128xf32, #tpu.memory_space<vmem>>, vector<8x128xf32>
    tpu.vector_store %arg6[%c0_12, %c0_13], %15 {strides = array<i32>} : memref<8x128xf32, #tpu.memory_space<vmem>>, vector<8x128xf32>,
    return
  }
  func.func @transform_0(%arg0: i32) -> (i32, i32) {
    %c0_i32 = arith.constant 0 : i32
    %c0_i32_0 = arith.constant 0 : i32
    return %arg0, %c0_i32 : i32, i32
  }
  func.func @transform_1(%arg0: i32) -> (i32, i32) {
    %c0_i32 = arith.constant 0 : i32
    %c0_i32_0 = arith.constant 0 : i32
    %c0_i32_1 = arith.constant 0 : i32
    return %c0_i32, %c0_i32_0 : i32, i32
  }
  func.func @transform_2(%arg0: i32) -> (i32, i32) {
    %c0_i32 = arith.constant 0 : i32
    %c0_i32_0 = arith.constant 0 : i32
    %c0_i32_1 = arith.constant 0 : i32
    return %c0_i32, %c0_i32_0 : i32, i32
  }
  func.func @transform_3(%arg0: i32) -> (i32, i32) {
    %c0_i32 = arith.constant 0 : i32
    %c0_i32_0 = arith.constant 0 : i32
    %c0_i32_1 = arith.constant 0 : i32
    return %c0_i32, %c0_i32_0 : i32, i32
  }
  func.func @transform_4(%arg0: i32) -> (i32, i32) {
    %c0_i32 = arith.constant 0 : i32
    %c0_i32_0 = arith.constant 0 : i32
    %c0_i32_1 = arith.constant 0 : i32
    return %c0_i32, %c0_i32_0 : i32, i32
  }
  func.func @transform_5(%arg0: i32) -> (i32, i32) {
    %c0_i32 = arith.constant 0 : i32
    %c0_i32_0 = arith.constant 0 : i32
    return %arg0, %c0_i32 : i32, i32
  }
}

</mosaic_0001>

<llo_original>
// kernel: encoder_forward.1
$region0: #{encoder_forward.1}
  #allocation0 [shape = 'u32[]', space=smem, size = 0x4, offset = 0x4, fixed_abs, tag = 'smem constant byte address 0x4 - core index']
  #allocation1 [shape = 'u32[144,128]{1,0:T(1,128)}', space=vmem, size = 0x12000, scoped, tag = 'internal scratch']
  %s0 = inlined_call_operand.vmem [shape: f32[16,32], index: 0, kind: input, shape index: {}]
  %s1 = inlined_call_operand.vmem [shape: f32[32,16], index: 1, kind: input, shape index: {}]
  %s2 = inlined_call_operand.vmem [shape: f32[1,16], index: 2, kind: input, shape index: {}]
  %s3 = inlined_call_operand.vmem [shape: f32[16,128], index: 3, kind: input, shape index: {}]
  %s4 = inlined_call_operand.vmem [shape: f32[1,128], index: 4, kind: input, shape index: {}]
  %s5 = inlined_call_operand.vmem [shape: f32[16,128], index: 5, kind: output, shape index: {}]
  %s6 = sld [smem:[#allocation0]]
  $region53: #{encoder_forward.1} parent=0
    _
  %s8 = ssub.s32 1, %s6
  %s9 = scalar_select 0, %s8, %s6
  loop: start=0, step=1, limit=4
  $region2: #{encoder_forward.1} parent=0 // loop_pre_header
    _
  $region3: #{encoder_forward.1} parent=0 // loop_header
    %s11 = sphi 0, %s15
    %p12 = scmp.ge.s32.totalorder %s11, 4
    %s21 = sphi 0, %s23
    %s24 = sphi 0, %s21
    %s25 = sphi 0, %s24
    %s41 = sphi 0, %s25
    %s45 = sphi 0, %s45
    %s47 = sphi 0, %s45
    %s48 = sphi 0, %s47
    %s62 = sphi 0, %s48
    %s66 = sphi 0, %s66
    %s68 = sphi 0, %s66
    %s69 = sphi 0, %s68
    %s83 = sphi 0, %s69
    %s87 = sphi 0, %s87
    %s89 = sphi 0, %s87
    %s90 = sphi 0, %s89
    %s104 = sphi 0, %s90
    %s108 = sphi 0, %s108
    %s110 = sphi 0, %s108
    %s111 = sphi 0, %s110
    %s125 = sphi 0, %s111
    %s131 = sphi 0, %s133
    %s134 = sphi 0, %s131
    %s135 = sphi 0, %s134
    %s151 = sphi 0, %s135
  $region4: #{encoder_forward.1} parent=0 // loop_header_branch
    %14 = sbr.rel (%p12) target = $region8
  $region5: #{encoder_forward.1} parent=0 // loop_body
    %s16 = ssub.s32 %s11, 1
    %s17 = ssub.s32 %s11, 2
    %s18 = sadd.s32 %s11, 1
    %s19 = ssub.s32 %s11, %s18
    %p20 = scmp.eq.s32.totalorder %s19, 0
    %s22 = sadd.s32 %s21, 1
    %s23 = scalar_select %p20, %s21, %s22
    %p26 = pneg %p20
    %p27 = scmp.eq.s32.totalorder %s11, 1
    %p28 = por %p26, %p27
    %p29 = scmp.ne.s32.totalorder %s21, %s24
    %p30 = scmp.eq.s32.totalorder %s11, 0
    %p31 = por %p29, %p30
    %p32 = scmp.ne.s32.totalorder %s21, %s24
    %p33 = scmp.eq.s32.totalorder %s16, 1
    %p34 = por %p32, %p33
    %p35 = scmp.ne.s32.totalorder %s24, %s25
    %p36 = scmp.eq.s32.totalorder %s16, 0
    %p37 = por %p35, %p36
    %p38 = scmp.ne.s32.totalorder %s24, %s25
    %p39 = scmp.eq.s32.totalorder %s17, 1
    %p40 = por %p38, %p39
    %p42 = scmp.ne.s32.totalorder %s25, %s41
    %p43 = scmp.eq.s32.totalorder %s17, 0
    %p44 = por %p42, %p43
    %s46 = sadd.s32 %s45, 1
    %p49 = scmp.eq.s32.totalorder %s11, 1
    %p50 = scmp.ne.s32.totalorder %s45, %s47
    %p51 = scmp.eq.s32.totalorder %s11, 0
    %p52 = por %p50, %p51
    %p53 = scmp.ne.s32.totalorder %s45, %s47
    %p54 = scmp.eq.s32.totalorder %s16, 1
    %p55 = por %p53, %p54
    %p56 = scmp.ne.s32.totalorder %s47, %s48
    %p57 = scmp.eq.s32.totalorder %s16, 0
    %p58 = por %p56, %p57
    %p59 = scmp.ne.s32.totalorder %s47, %s48
    %p60 = scmp.eq.s32.totalorder %s17, 1
    %p61 = por %p59, %p60
    %p63 = scmp.ne.s32.totalorder %s48, %s62
    %p64 = scmp.eq.s32.totalorder %s17, 0
    %p65 = por %p63, %p64
    %s67 = sadd.s32 %s66, 1
    %p70 = scmp.eq.s32.totalorder %s11, 1
    %p71 = scmp.ne.s32.totalorder %s66, %s68
    %p72 = scmp.eq.s32.totalorder %s11, 0
    %p73 = por %p71, %p72
    %p74 = scmp.ne.s32.totalorder %s66, %s68
    %p75 = scmp.eq.s32.totalorder %s16, 1
    %p76 = por %p74, %p75
    %p77 = scmp.ne.s32.totalorder %s68, %s69
    %p78 = scmp.eq.s32.totalorder %s16, 0
    %p79 = por %p77, %p78
    %p80 = scmp.ne.s32.totalorder %s68, %s69
    %p81 = scmp.eq.s32.totalorder %s17, 1
    %p82 = por %p80, %p81
    %p84 = scmp.ne.s32.totalorder %s69, %s83
    %p85 = scmp.eq.s32.totalorder %s17, 0
    %p86 = por %p84, %p85
    %s88 = sadd.s32 %s87, 1
    %p91 = scmp.eq.s32.totalorder %s11, 1
    %p92 = scmp.ne.s32.totalorder %s87, %s89
    %p93 = scmp.eq.s32.totalorder %s11, 0
    %p94 = por %p92, %p93
    %p95 = scmp.ne.s32.totalorder %s87, %s89
    %p96 = scmp.eq.s32.totalorder %s16, 1
    %p97 = por %p95, %p96
    %p98 = scmp.ne.s32.totalorder %s89, %s90
    %p99 = scmp.eq.s32.totalorder %s16, 0
    %p100 = por %p98, %p99
    %p101 = scmp.ne.s32.totalorder %s89, %s90
    %p102 = scmp.eq.s32.totalorder %s17, 1
    %p103 = por %p101, %p102
    %p105 = scmp.ne.s32.totalorder %s90, %s104
    %p106 = scmp.eq.s32.totalorder %s17, 0
    %p107 = por %p105, %p106
    %s109 = sadd.s32 %s108, 1
    %p112 = scmp.eq.s32.totalorder %s11, 1
    %p113 = scmp.ne.s32.totalorder %s108, %s110
    %p114 = scmp.eq.s32.totalorder %s11, 0
    %p115 = por %p113, %p114
    %p116 = scmp.ne.s32.totalorder %s108, %s110
    %p117 = scmp.eq.s32.totalorder %s16, 1
    %p118 = por %p116, %p117
    %p119 = scmp.ne.s32.totalorder %s110, %s111
    %p120 = scmp.eq.s32.totalorder %s16, 0
    %p121 = por %p119, %p120
    %p122 = scmp.ne.s32.totalorder %s110, %s111
    %p123 = scmp.eq.s32.totalorder %s17, 1
    %p124 = por %p122, %p123
    %p126 = scmp.ne.s32.totalorder %s111, %s125
    %p127 = scmp.eq.s32.totalorder %s17, 0
    %p128 = por %p126, %p127
    %s129 = ssub.s32 %s11, %s18
    %p130 = scmp.eq.s32.totalorder %s129, 0
    %s132 = sadd.s32 %s131, 1
    %s133 = scalar_select %p130, %s131, %s132
    %p136 = pneg %p130
    %p137 = scmp.eq.s32.totalorder %s11, 1
    %p138 = por %p136, %p137
    %p139 = scmp.ne.s32.totalorder %s131, %s134
    %p140 = scmp.eq.s32.totalorder %s11, 0
    %p141 = por %p139, %p140
    %p142 = scmp.ne.s32.totalorder %s131, %s134
    %p143 = scmp.eq.s32.totalorder %s16, 1
    %p144 = por %p142, %p143
    %p145 = scmp.ne.s32.totalorder %s134, %s135
    %p146 = scmp.eq.s32.totalorder %s16, 0
    %p147 = por %p145, %p146
    %p148 = scmp.ne.s32.totalorder %s134, %s135
    %p149 = scmp.eq.s32.totalorder %s17, 1
    %p150 = por %p148, %p149
    %p152 = scmp.ne.s32.totalorder %s135, %s151
    %p153 = scmp.eq.s32.totalorder %s17, 0
    %p154 = por %p152, %p153
    %p155 = scmp.le.s32.totalorder 1, %s11
    %p156 = scmp.lt.s32.totalorder %s11, 3
    %p157 = pnand %p155, %p156
    %p158 = pneg %p157
    // Predicated region
    $region9: #{encoder_forward.1} parent=5 // pred_check
      _
    $region10: #{encoder_forward.1} parent=5 // pred_check_branch
      %160 = sbr.rel (%p157) target = $region12
    $region11: #{encoder_forward.1} parent=5 // pred_region
      %s161 = ssub.s32 %s11, 1
      // Predicated region
      $region13: #{encoder_forward.1} parent=11 // pred_check
        %p162 = pneg %p58
      $region14: #{encoder_forward.1} parent=11 // pred_check_branch
        %164 = sbr.rel (%p162) target = $region16
      $region15: #{encoder_forward.1} parent=11 // pred_region
        _
      $region16: #{encoder_forward.1} parent=11 // pred_fallthru
        _
      // Predicated region
      $region17: #{encoder_forward.1} parent=11 // pred_check
        %p165 = pneg %p79
      $region18: #{encoder_forward.1} parent=11 // pred_check_branch
        %167 = sbr.rel (%p165) target = $region20
      $region19: #{encoder_forward.1} parent=11 // pred_region
        _
      $region20: #{encoder_forward.1} parent=11 // pred_fallthru
        _
      // Predicated region
      $region21: #{encoder_forward.1} parent=11 // pred_check
        %p168 = pneg %p100
      $region22: #{encoder_forward.1} parent=11 // pred_check_branch
        %170 = sbr.rel (%p168) target = $region24
      $region23: #{encoder_forward.1} parent=11 // pred_region
        _
      $region24: #{encoder_forward.1} parent=11 // pred_fallthru
        _
      // Predicated region
      $region25: #{encoder_forward.1} parent=11 // pred_check
        %p171 = pneg %p121
      $region26: #{encoder_forward.1} parent=11 // pred_check_branch
        %173 = sbr.rel (%p171) target = $region28
      $region27: #{encoder_forward.1} parent=11 // pred_region
        _
      $region28: #{encoder_forward.1} parent=11 // pred_fallthru
        _
    $region12: #{encoder_forward.1} parent=5 // pred_fallthru
      _
    %p174 = scmp.lt.s32.totalorder %s11, 2
    // Predicated region
    $region29: #{encoder_forward.1} parent=5 // pred_check
      %p175 = pneg %p174
    $region30: #{encoder_forward.1} parent=5 // pred_check_branch
      %177 = sbr.rel (%p175) target = $region32
    $region31: #{encoder_forward.1} parent=5 // pred_region
      // Predicated region
      $region33: #{encoder_forward.1} parent=31 // pred_check
        %p178 = pneg %p31
      $region34: #{encoder_forward.1} parent=31 // pred_check_branch
        %180 = sbr.rel (%p178) target = $region36
      $region35: #{encoder_forward.1} parent=31 // pred_region
        %p181 = scmp.lt.s32.totalorder %s11, 1
        %s182 = scalar_select %p181, %s11, 1
        %s183 = smul.addr %s182, 8
        %s184 = scalar_lea.vmem %s0, %s183
      $region36: #{encoder_forward.1} parent=31 // pred_fallthru
        _
    $region32: #{encoder_forward.1} parent=5 // pred_fallthru
      _
    %p185 = scmp.le.s32.totalorder 1, %s11
    %p186 = scmp.lt.s32.totalorder %s11, 3
    %p187 = pnand %p185, %p186
    %p188 = pneg %p187
    // Predicated region
    $region37: #{encoder_forward.1} parent=5 // pred_check
      _
    $region38: #{encoder_forward.1} parent=5 // pred_check_branch
      %190 = sbr.rel (%p187) target = $region40
    $region39: #{encoder_forward.1} parent=5 // pred_region
      %s191 = ssub.s32 %s11, 1
      %p192 = scmp.lt.s32.totalorder %s16, 1
      %s193 = scalar_select %p192, %s16, 1
      %s194 = smul.addr %s193, 8
      %s195 = scalar_lea.vmem %s0, %s194
      %p196 = pneg %p37
      %p197 = pneg %p34
      %p198 = pneg %p58
      %p199 = pneg %p55
      %p200 = pneg %p79
      %p201 = pneg %p76
      %p202 = pneg %p100
      %p203 = pneg %p97
      %p204 = pneg %p121
      %p205 = pneg %p118
      %p206 = pneg %p147
      %p207 = pneg %p144
      %p208 = scmp.lt.s32.totalorder %s16, 1
      %s209 = scalar_select %p208, %s16, 1
      %s210 = smul.addr %s209, 8
      %s211 = scalar_lea.vmem %s5, %s210
      %p212 = scmp.lt.s32.totalorder %s16, 1
      %s213 = scalar_select %p212, %s16, 1
      %s214 = smul.addr %s213, 8
      %s215 = scalar_lea.vmem %s0, %s214
      %p216 = scmp.lt.s32.totalorder %s16, 1
      %s217 = scalar_select %p216, %s16, 1
      %s218 = smul.addr %s217, 8
      %s219 = scalar_lea.vmem %s5, %s218
      %v220 = vld [vmem:[%s215] sm:$0xff]
      %v221 = vld [vmem:[%s1] sm:$0xff]
      %v222 = vld [vmem:[%s1 + $0x8] sm:$0xff]
      %v223 = vld [vmem:[%s1 + $0x10] sm:$0xff]
      %v224 = vld [vmem:[%s1 + $0x18] sm:$0xff]
      %v225 = vld [vmem:[%s2] sm:$0x1]
      %v227 = vlaneseq
      %v228 = vshrl.u32 %v227, 7
      %v229 = vsub.s32 0, %v228
      %v230 = vrot.slane %v225, %v229
      %vm232 = vcmask 261120
      %v234 = vsel %vm232, %v220, 0
      %236 = vmatprep.subr.mxu0 0.0
      %v237 = vand.u32 %v221, 4294901760
      %238 = vmatpush1.msra.mxu0 %v237
      %239 = vmatprep.subr.mxu0 0.0
      %v240 = vand.u32 %v222, 4294901760
      %241 = vmatpush1.msra.mxu0 %v240
      %242 = vmatprep.subr.mxu0 0.0
      %v243 = vand.u32 %v223, 4294901760
      %244 = vmatpush1.msra.mxu0 %v243
      %245 = vmatprep.subr.mxu0 0.0
      %v246 = vand.u32 %v224, 4294901760
      %247 = vmatpush1.msra.mxu0 %v246
      %248 = vmatprep.subr.mxu0 0.0
      %249 = vmatpush1.msra.mxu0 0.0
      %250 = vmatprep.subr.mxu0 0.0
      %251 = vmatpush1.msra.mxu0 0.0
      %252 = vmatprep.subr.mxu0 0.0
      %253 = vmatpush1.msra.mxu0 0.0
      %254 = vmatprep.subr.mxu0 0.0
      %255 = vmatpush1.msra.mxu0 0.0
      %256 = vmatprep.subr.mxu0 0.0
      %257 = vmatpush1.msra.mxu0 0.0
      %258 = vmatprep.subr.mxu0 0.0
      %259 = vmatpush1.msra.mxu0 0.0
      %260 = vmatprep.subr.mxu0 0.0
      %261 = vmatpush1.msra.mxu0 0.0
      %262 = vmatprep.subr.mxu0 0.0
      %263 = vmatpush1.msra.mxu0 0.0
      %264 = vmatprep.subr.mxu0 0.0
      %265 = vmatpush1.msra.mxu0 0.0
      %266 = vmatprep.subr.mxu0 0.0
      %267 = vmatpush1.msra.mxu0 0.0
      %268 = vmatprep.subr.mxu0 0.0
      %269 = vmatpush1.msra.mxu0 0.0
      %270 = vmatprep.subr.mxu0 0.0
      %271 = vmatpush1.msra.mxu0 0.0
      %272 = vmatprep.subr.mxu0 0.0
      %273 = vmatpush1.msra.mxu0 0.0
      %274 = vmatprep.subr.mxu0 0.0
      %275 = vmatpush1.msra.mxu0 0.0
      %276 = vmatprep.subr.mxu0 0.0
      %277 = vmatpush1.msra.mxu0 0.0
      %278 = vmatprep.subr.mxu0 0.0
      %279 = vmatpush1.msra.mxu0 0.0
      %280 = vmatprep.subr.mxu0 0.0
      %281 = vmatpush1.msra.mxu0 0.0
      %282 = vmatprep.subr.mxu0 0.0
      %283 = vmatpush1.msra.mxu0 0.0
      %284 = vmatprep.subr.mxu0 0.0
      %285 = vmatpush1.msra.mxu0 0.0
      %286 = vmatprep.subr.mxu0 0.0
      %287 = vmatpush1.msra.mxu0 0.0
      %288 = vmatprep.subr.mxu0 0.0
      %289 = vmatpush1.msra.mxu0 0.0
      %290 = vmatprep.subr.mxu0 0.0
      %291 = vmatpush1.msra.mxu0 0.0
      %292 = vmatprep.subr.mxu0 0.0
      %293 = vmatpush1.msra.mxu0 0.0
      %294 = vmatprep.subr.mxu0 0.0
      %295 = vmatpush1.msra.mxu0 0.0
      %296 = vmatprep.subr.mxu0 0.0
      %297 = vmatpush1.msra.mxu0 0.0
      %298 = vmatprep.subr.mxu0 0.0
      %299 = vmatpush1.msra.mxu0 0.0
      %300 = vmatprep.subr.mxu0 0.0
      %301 = vmatpush1.msra.mxu0 0.0
      %302 = vmatprep.subr.mxu0 0.0
      %303 = vmatpush1.msra.mxu0 0.0
      %304 = vmatprep.mubr.f32.mxu0 0.0
      %v305 = vand.u32 %v234, 4294901760
      %v306 = vsub.f32 %v234, %v305
      %v307 = vand.u32 %v306, 4294901760
      %v308 = vsub.f32 %v306, %v307
      %v309 = vand.u32 %v308, 4294901760
      %310 = vmatmul.mubr.f32.gmra.mrb[0].mxu0 %v309
      %v311 = vpop.f32.mrb[0].mxu0
      %v312 = vadd.f32 %v230, %v311
      %v313 = vpop.f32.mrb[0].mxu0
      %314 = vdwg.mxu0
      %315 = vmatprep.subr.mxu0 0.0
      %v316 = vand.u32 %v221, 4294901760
      %v317 = vsub.f32 %v221, %v316
      %v318 = vand.u32 %v317, 4294901760
      %v319 = vsub.f32 %v317, %v318
      %v320 = vand.u32 %v319, 4294901760
      %321 = vmatpush1.msra.mxu0 %v320
      %322 = vmatprep.subr.mxu0 0.0
      %v323 = vand.u32 %v222, 4294901760
      %v324 = vsub.f32 %v222, %v323
      %v325 = vand.u32 %v324, 4294901760
      %v326 = vsub.f32 %v324, %v325
      %v327 = vand.u32 %v326, 4294901760
      %328 = vmatpush1.msra.mxu0 %v327
      %329 = vmatprep.subr.mxu0 0.0
      %v330 = vand.u32 %v223, 4294901760
      %v331 = vsub.f32 %v223, %v330
      %v332 = vand.u32 %v331, 4294901760
      %v333 = vsub.f32 %v331, %v332
      %v334 = vand.u32 %v333, 4294901760
      %335 = vmatpush1.msra.mxu0 %v334
      %336 = vmatprep.subr.mxu0 0.0
      %v337 = vand.u32 %v224, 4294901760
      %v338 = vsub.f32 %v224, %v337
      %v339 = vand.u32 %v338, 4294901760
      %v340 = vsub.f32 %v338, %v339
      %v341 = vand.u32 %v340, 4294901760
      %342 = vmatpush1.msra.mxu0 %v341
      %343 = vmatprep.subr.mxu0 0.0
      %344 = vmatpush1.msra.mxu0 0.0
      %345 = vmatprep.subr.mxu0 0.0
      %346 = vmatpush1.msra.mxu0 0.0
      %347 = vmatprep.subr.mxu0 0.0
      %348 = vmatpush1.msra.mxu0 0.0
      %349 = vmatprep.subr.mxu0 0.0
      %350 = vmatpush1.msra.mxu0 0.0
      %351 = vmatprep.subr.mxu0 0.0
      %352 = vmatpush1.msra.mxu0 0.0
      %353 = vmatprep.subr.mxu0 0.0
      %354 = vmatpush1.msra.mxu0 0.0
      %355 = vmatprep.subr.mxu0 0.0
      %356 = vmatpush1.msra.mxu0 0.0
      %357 = vmatprep.subr.mxu0 0.0
      %358 = vmatpush1.msra.mxu0 0.0
      %359 = vmatprep.subr.mxu0 0.0
      %360 = vmatpush1.msra.mxu0 0.0
      %361 = vmatprep.subr.mxu0 0.0
      %362 = vmatpush1.msra.mxu0 0.0
      %363 = vmatprep.subr.mxu0 0.0
      %364 = vmatpush1.msra.mxu0 0.0
      %365 = vmatprep.subr.mxu0 0.0
      %366 = vmatpush1.msra.mxu0 0.0
      %367 = vmatprep.subr.mxu0 0.0
      %368 = vmatpush1.msra.mxu0 0.0
      %369 = vmatprep.subr.mxu0 0.0
      %370 = vmatpush1.msra.mxu0 0.0
      %371 = vmatprep.subr.mxu0 0.0
      %372 = vmatpush1.msra.mxu0 0.0
      %373 = vmatprep.subr.mxu0 0.0
      %374 = vmatpush1.msra.mxu0 0.0
      %375 = vmatprep.subr.mxu0 0.0
      %376 = vmatpush1.msra.mxu0 0.0
      %377 = vmatprep.subr.mxu0 0.0
      %378 = vmatpush1.msra.mxu0 0.0
      %379 = vmatprep.subr.mxu0 0.0
      %380 = vmatpush1.msra.mxu0 0.0
      %381 = vmatprep.subr.mxu0 0.0
      %382 = vmatpush1.msra.mxu0 0.0
      %383 = vmatprep.subr.mxu0 0.0
      %384 = vmatpush1.msra.mxu0 0.0
      %385 = vmatprep.subr.mxu0 0.0
      %386 = vmatpush1.msra.mxu0 0.0
      %387 = vmatprep.subr.mxu0 0.0
      %388 = vmatpush1.msra.mxu0 0.0
      %389 = vmatprep.subr.mxu0 0.0
      %390 = vmatpush1.msra.mxu0 0.0
      %391 = vmatprep.subr.mxu0 0.0
      %392 = vmatpush1.msra.mxu0 0.0
      %393 = vmatprep.subr.mxu0 0.0
      %394 = vmatpush1.msra.mxu0 0.0
      %395 = vmatprep.subr.mxu0 0.0
      %396 = vmatpush1.msra.mxu0 0.0
      %397 = vmatprep.subr.mxu0 0.0
      %398 = vmatpush1.msra.mxu0 0.0
      %399 = vmatprep.mubr.f32.mxu0 0.0
      %v400 = vand.u32 %v234, 4294901760
      %401 = vmatmul.mubr.f32.gmra.mrb[0].mxu0 %v400
      %v402 = vpop.f32.mrb[0].mxu0
      %v403 = vadd.f32 %v312, %v402
      %v404 = vpop.f32.mrb[0].mxu0
      %405 = vdwg.mxu0
      %406 = vmatprep.subr.mxu0 0.0
      %v407 = vand.u32 %v221, 4294901760
      %v408 = vsub.f32 %v221, %v407
      %409 = vmatpush1.msra.mxu0 %v408
      %410 = vmatprep.subr.mxu0 0.0
      %v411 = vand.u32 %v222, 4294901760
      %v412 = vsub.f32 %v222, %v411
      %413 = vmatpush1.msra.mxu0 %v412
      %414 = vmatprep.subr.mxu0 0.0
      %v415 = vand.u32 %v223, 4294901760
      %v416 = vsub.f32 %v223, %v415
      %417 = vmatpush1.msra.mxu0 %v416
      %418 = vmatprep.subr.mxu0 0.0
      %v419 = vand.u32 %v224, 4294901760
      %v420 = vsub.f32 %v224, %v419
      %421 = vmatpush1.msra.mxu0 %v420
      %422 = vmatprep.subr.mxu0 0.0
      %423 = vmatpush1.msra.mxu0 0.0
      %424 = vmatprep.subr.mxu0 0.0
      %425 = vmatpush1.msra.mxu0 0.0
      %426 = vmatprep.subr.mxu0 0.0
      %427 = vmatpush1.msra.mxu0 0.0
      %428 = vmatprep.subr.mxu0 0.0
      %429 = vmatpush1.msra.mxu0 0.0
      %430 = vmatprep.subr.mxu0 0.0
      %431 = vmatpush1.msra.mxu0 0.0
      %432 = vmatprep.subr.mxu0 0.0
      %433 = vmatpush1.msra.mxu0 0.0
      %434 = vmatprep.subr.mxu0 0.0
      %435 = vmatpush1.msra.mxu0 0.0
      %436 = vmatprep.subr.mxu0 0.0
      %437 = vmatpush1.msra.mxu0 0.0
      %438 = vmatprep.subr.mxu0 0.0
      %439 = vmatpush1.msra.mxu0 0.0
      %440 = vmatprep.subr.mxu0 0.0
      %441 = vmatpush1.msra.mxu0 0.0
      %442 = vmatprep.subr.mxu0 0.0
      %443 = vmatpush1.msra.mxu0 0.0
      %444 = vmatprep.subr.mxu0 0.0
      %445 = vmatpush1.msra.mxu0 0.0
      %446 = vmatprep.subr.mxu0 0.0
      %447 = vmatpush1.msra.mxu0 0.0
      %448 = vmatprep.subr.mxu0 0.0
      %449 = vmatpush1.msra.mxu0 0.0
      %450 = vmatprep.subr.mxu0 0.0
      %451 = vmatpush1.msra.mxu0 0.0
      %452 = vmatprep.subr.mxu0 0.0
      %453 = vmatpush1.msra.mxu0 0.0
      %454 = vmatprep.subr.mxu0 0.0
      %455 = vmatpush1.msra.mxu0 0.0
      %456 = vmatprep.subr.mxu0 0.0
      %457 = vmatpush1.msra.mxu0 0.0
      %458 = vmatprep.subr.mxu0 0.0
      %459 = vmatpush1.msra.mxu0 0.0
      %460 = vmatprep.subr.mxu0 0.0
      %461 = vmatpush1.msra.mxu0 0.0
      %462 = vmatprep.subr.mxu0 0.0
      %463 = vmatpush1.msra.mxu0 0.0
      %464 = vmatprep.subr.mxu0 0.0
      %465 = vmatpush1.msra.mxu0 0.0
      %466 = vmatprep.subr.mxu0 0.0
      %467 = vmatpush1.msra.mxu0 0.0
      %468 = vmatprep.subr.mxu0 0.0
      %469 = vmatpush1.msra.mxu0 0.0
      %470 = vmatprep.subr.mxu0 0.0
      %471 = vmatpush1.msra.mxu0 0.0
      %472 = vmatprep.subr.mxu0 0.0
      %473 = vmatpush1.msra.mxu0 0.0
      %474 = vmatprep.subr.mxu0 0.0
      %475 = vmatpush1.msra.mxu0 0.0
      %476 = vmatprep.subr.mxu0 0.0
      %477 = vmatpush1.msra.mxu0 0.0
      %478 = vmatprep.mubr.f32.mxu0 0.0
      %v479 = vand.u32 %v234, 4294901760
      %v480 = vsub.f32 %v234, %v479
      %481 = vmatmul.mubr.f32.gmra.mrb[0].mxu0 %v480
      %v482 = vpop.f32.mrb[0].mxu0
      %v483 = vadd.f32 %v403, %v482
      %v484 = vpop.f32.mrb[0].mxu0
      %485 = vdwg.mxu0
      %486 = vmatprep.subr.mxu0 0.0
      %v487 = vand.u32 %v221, 4294901760
      %488 = vmatpush1.msra.mxu0 %v487
      %489 = vmatprep.subr.mxu0 0.0
      %v490 = vand.u32 %v222, 4294901760
      %491 = vmatpush1.msra.mxu0 %v490
      %492 = vmatprep.subr.mxu0 0.0
      %v493 = vand.u32 %v223, 4294901760
      %494 = vmatpush1.msra.mxu0 %v493
      %495 = vmatprep.subr.mxu0 0.0
      %v496 = vand.u32 %v224, 4294901760
      %497 = vmatpush1.msra.mxu0 %v496
      %498 = vmatprep.subr.mxu0 0.0
      %499 = vmatpush1.msra.mxu0 0.0
      %500 = vmatprep.subr.mxu0 0.0
      %501 = vmatpush1.msra.mxu0 0.0
      %502 = vmatprep.subr.mxu0 0.0
      %503 = vmatpush1.msra.mxu0 0.0
      %504 = vmatprep.subr.mxu0 0.0
      %505 = vmatpush1.msra.mxu0 0.0
      %506 = vmatprep.subr.mxu0 0.0
      %507 = vmatpush1.msra.mxu0 0.0
      %508 = vmatprep.subr.mxu0 0.0
      %509 = vmatpush1.msra.mxu0 0.0
      %510 = vmatprep.subr.mxu0 0.0
      %511 = vmatpush1.msra.mxu0 0.0
      %512 = vmatprep.subr.mxu0 0.0
      %513 = vmatpush1.msra.mxu0 0.0
      %514 = vmatprep.subr.mxu0 0.0
      %515 = vmatpush1.msra.mxu0 0.0
      %516 = vmatprep.subr.mxu0 0.0
      %517 = vmatpush1.msra.mxu0 0.0
      %518 = vmatprep.subr.mxu0 0.0
      %519 = vmatpush1.msra.mxu0 0.0
      %520 = vmatprep.subr.mxu0 0.0
      %521 = vmatpush1.msra.mxu0 0.0
      %522 = vmatprep.subr.mxu0 0.0
      %523 = vmatpush1.msra.mxu0 0.0
      %524 = vmatprep.subr.mxu0 0.0
      %525 = vmatpush1.msra.mxu0 0.0
      %526 = vmatprep.subr.mxu0 0.0
      %527 = vmatpush1.msra.mxu0 0.0
      %528 = vmatprep.subr.mxu0 0.0
      %529 = vmatpush1.msra.mxu0 0.0
      %530 = vmatprep.subr.mxu0 0.0
      %531 = vmatpush1.msra.mxu0 0.0
      %532 = vmatprep.subr.mxu0 0.0
      %533 = vmatpush1.msra.mxu0 0.0
      %534 = vmatprep.subr.mxu0 0.0
      %535 = vmatpush1.msra.mxu0 0.0
      %536 = vmatprep.subr.mxu0 0.0
      %537 = vmatpush1.msra.mxu0 0.0
      %538 = vmatprep.subr.mxu0 0.0
      %539 = vmatpush1.msra.mxu0 0.0
      %540 = vmatprep.subr.mxu0 0.0
      %541 = vmatpush1.msra.mxu0 0.0
      %542 = vmatprep.subr.mxu0 0.0
      %543 = vmatpush1.msra.mxu0 0.0
      %544 = vmatprep.subr.mxu0 0.0
      %545 = vmatpush1.msra.mxu0 0.0
      %546 = vmatprep.subr.mxu0 0.0
      %547 = vmatpush1.msra.mxu0 0.0
      %548 = vmatprep.subr.mxu0 0.0
      %549 = vmatpush1.msra.mxu0 0.0
      %550 = vmatprep.subr.mxu0 0.0
      %551 = vmatpush1.msra.mxu0 0.0
      %552 = vmatprep.subr.mxu0 0.0
      %553 = vmatpush1.msra.mxu0 0.0
      %554 = vmatprep.mubr.f32.mxu0 0.0
      %v555 = vand.u32 %v234, 4294901760
      %v556 = vsub.f32 %v234, %v555
      %v557 = vand.u32 %v556, 4294901760
      %558 = vmatmul.mubr.f32.gmra.mrb[0].mxu0 %v557
      %v559 = vpop.f32.mrb[0].mxu0
      %v560 = vadd.f32 %v483, %v559
      %v561 = vpop.f32.mrb[0].mxu0
      %562 = vdwg.mxu0
      %563 = vmatprep.subr.mxu0 0.0
      %v564 = vand.u32 %v221, 4294901760
      %v565 = vsub.f32 %v221, %v564
      %v566 = vand.u32 %v565, 4294901760
      %567 = vmatpush1.msra.mxu0 %v566
      %568 = vmatprep.subr.mxu0 0.0
      %v569 = vand.u32 %v222, 4294901760
      %v570 = vsub.f32 %v222, %v569
      %v571 = vand.u32 %v570, 4294901760
      %572 = vmatpush1.msra.mxu0 %v571
      %573 = vmatprep.subr.mxu0 0.0
      %v574 = vand.u32 %v223, 4294901760
      %v575 = vsub.f32 %v223, %v574
      %v576 = vand.u32 %v575, 4294901760
      %577 = vmatpush1.msra.mxu0 %v576
      %578 = vmatprep.subr.mxu0 0.0
      %v579 = vand.u32 %v224, 4294901760
      %v580 = vsub.f32 %v224, %v579
      %v581 = vand.u32 %v580, 4294901760
      %582 = vmatpush1.msra.mxu0 %v581
      %583 = vmatprep.subr.mxu0 0.0
      %584 = vmatpush1.msra.mxu0 0.0
      %585 = vmatprep.subr.mxu0 0.0
      %586 = vmatpush1.msra.mxu0 0.0
      %587 = vmatprep.subr.mxu0 0.0
      %588 = vmatpush1.msra.mxu0 0.0
      %589 = vmatprep.subr.mxu0 0.0
      %590 = vmatpush1.msra.mxu0 0.0
      %591 = vmatprep.subr.mxu0 0.0
      %592 = vmatpush1.msra.mxu0 0.0
      %593 = vmatprep.subr.mxu0 0.0
      %594 = vmatpush1.msra.mxu0 0.0
      %595 = vmatprep.subr.mxu0 0.0
      %596 = vmatpush1.msra.mxu0 0.0
      %597 = vmatprep.subr.mxu0 0.0
      %598 = vmatpush1.msra.mxu0 0.0
      %599 = vmatprep.subr.mxu0 0.0
      %600 = vmatpush1.msra.mxu0 0.0
      %601 = vmatprep.subr.mxu0 0.0
      %602 = vmatpush1.msra.mxu0 0.0
      %603 = vmatprep.subr.mxu0 0.0
      %604 = vmatpush1.msra.mxu0 0.0
      %605 = vmatprep.subr.mxu0 0.0
      %606 = vmatpush1.msra.mxu0 0.0
      %607 = vmatprep.subr.mxu0 0.0
      %608 = vmatpush1.msra.mxu0 0.0
      %609 = vmatprep.subr.mxu0 0.0
      %610 = vmatpush1.msra.mxu0 0.0
      %611 = vmatprep.subr.mxu0 0.0
      %612 = vmatpush1.msra.mxu0 0.0
      %613 = vmatprep.subr.mxu0 0.0
      %614 = vmatpush1.msra.mxu0 0.0
      %615 = vmatprep.subr.mxu0 0.0
      %616 = vmatpush1.msra.mxu0 0.0
      %617 = vmatprep.subr.mxu0 0.0
      %618 = vmatpush1.msra.mxu0 0.0
      %619 = vmatprep.subr.mxu0 0.0
      %620 = vmatpush1.msra.mxu0 0.0
      %621 = vmatprep.subr.mxu0 0.0
      %622 = vmatpush1.msra.mxu0 0.0
      %623 = vmatprep.subr.mxu0 0.0
      %624 = vmatpush1.msra.mxu0 0.0
      %625 = vmatprep.subr.mxu0 0.0
      %626 = vmatpush1.msra.mxu0 0.0
      %627 = vmatprep.subr.mxu0 0.0
      %628 = vmatpush1.msra.mxu0 0.0
      %629 = vmatprep.subr.mxu0 0.0
      %630 = vmatpush1.msra.mxu0 0.0
      %631 = vmatprep.subr.mxu0 0.0
      %632 = vmatpush1.msra.mxu0 0.0
      %633 = vmatprep.subr.mxu0 0.0
      %634 = vmatpush1.msra.mxu0 0.0
      %635 = vmatprep.subr.mxu0 0.0
      %636 = vmatpush1.msra.mxu0 0.0
      %637 = vmatprep.subr.mxu0 0.0
      %638 = vmatpush1.msra.mxu0 0.0
      %639 = vmatprep.mubr.f32.mxu0 0.0
      %v640 = vand.u32 %v234, 4294901760
      %641 = vmatmul.mubr.f32.gmra.mrb[0].mxu0 %v640
      %v642 = vpop.f32.mrb[0].mxu0
      %v643 = vadd.f32 %v560, %v642
      %v644 = vpop.f32.mrb[0].mxu0
      %645 = vdwg.mxu0
      %646 = vmatprep.subr.mxu0 0.0
      %v647 = vand.u32 %v221, 4294901760
      %648 = vmatpush1.msra.mxu0 %v647
      %649 = vmatprep.subr.mxu0 0.0
      %v650 = vand.u32 %v222, 4294901760
      %651 = vmatpush1.msra.mxu0 %v650
      %652 = vmatprep.subr.mxu0 0.0
      %v653 = vand.u32 %v223, 4294901760
      %654 = vmatpush1.msra.mxu0 %v653
      %655 = vmatprep.subr.mxu0 0.0
      %v656 = vand.u32 %v224, 4294901760
      %657 = vmatpush1.msra.mxu0 %v656
      %658 = vmatprep.subr.mxu0 0.0
      %659 = vmatpush1.msra.mxu0 0.0
      %660 = vmatprep.subr.mxu0 0.0
      %661 = vmatpush1.msra.mxu0 0.0
      %662 = vmatprep.subr.mxu0 0.0
      %663 = vmatpush1.msra.mxu0 0.0
      %664 = vmatprep.subr.mxu0 0.0
      %665 = vmatpush1.msra.mxu0 0.0
      %666 = vmatprep.subr.mxu0 0.0
      %667 = vmatpush1.msra.mxu0 0.0
      %668 = vmatprep.subr.mxu0 0.0
      %669 = vmatpush1.msra.mxu0 0.0
      %670 = vmatprep.subr.mxu0 0.0
      %671 = vmatpush1.msra.mxu0 0.0
      %672 = vmatprep.subr.mxu0 0.0
      %673 = vmatpush1.msra.mxu0 0.0
      %674 = vmatprep.subr.mxu0 0.0
      %675 = vmatpush1.msra.mxu0 0.0
      %676 = vmatprep.subr.mxu0 0.0
      %677 = vmatpush1.msra.mxu0 0.0
      %678 = vmatprep.subr.mxu0 0.0
      %679 = vmatpush1.msra.mxu0 0.0
      %680 = vmatprep.subr.mxu0 0.0
      %681 = vmatpush1.msra.mxu0 0.0
      %682 = vmatprep.subr.mxu0 0.0
      %683 = vmatpush1.msra.mxu0 0.0
      %684 = vmatprep.subr.mxu0 0.0
      %685 = vmatpush1.msra.mxu0 0.0
      %686 = vmatprep.subr.mxu0 0.0
      %687 = vmatpush1.msra.mxu0 0.0
      %688 = vmatprep.subr.mxu0 0.0
      %689 = vmatpush1.msra.mxu0 0.0
      %690 = vmatprep.subr.mxu0 0.0
      %691 = vmatpush1.msra.mxu0 0.0
      %692 = vmatprep.subr.mxu0 0.0
      %693 = vmatpush1.msra.mxu0 0.0
      %694 = vmatprep.subr.mxu0 0.0
      %695 = vmatpush1.msra.mxu0 0.0
      %696 = vmatprep.subr.mxu0 0.0
      %697 = vmatpush1.msra.mxu0 0.0
      %698 = vmatprep.subr.mxu0 0.0
      %699 = vmatpush1.msra.mxu0 0.0
      %700 = vmatprep.subr.mxu0 0.0
      %701 = vmatpush1.msra.mxu0 0.0
      %702 = vmatprep.subr.mxu0 0.0
      %703 = vmatpush1.msra.mxu0 0.0
      %704 = vmatprep.subr.mxu0 0.0
      %705 = vmatpush1.msra.mxu0 0.0
      %706 = vmatprep.subr.mxu0 0.0
      %707 = vmatpush1.msra.mxu0 0.0
      %708 = vmatprep.subr.mxu0 0.0
      %709 = vmatpush1.msra.mxu0 0.0
      %710 = vmatprep.subr.mxu0 0.0
      %711 = vmatpush1.msra.mxu0 0.0
      %712 = vmatprep.subr.mxu0 0.0
      %713 = vmatpush1.msra.mxu0 0.0
      %714 = vmatprep.mubr.f32.mxu0 0.0
      %v715 = vand.u32 %v234, 4294901760
      %716 = vmatmul.mubr.f32.gmra.mrb[0].mxu0 %v715
      %v717 = vpop.f32.mrb[0].mxu0
      %v718 = vadd.f32 %v643, %v717
      %v719 = vpop.f32.mrb[0].mxu0
      %720 = vdwg.mxu0
      %vm721 = vcmp.ge.f32.partialorder %v718, 0.0
      %v722 = vmul.f32 %v718, 0.3
      %v723 = vsel %vm721, %v718, %v722
      %v724 = vld [vmem:[%s3] sm:$0xff]
      %v725 = vld [vmem:[%s3 + $0x8] sm:$0xff]
      %v726 = vld [vmem:[%s4] sm:$0x1]
      %v728 = vlaneseq
      %v729 = vshrl.u32 %v728, 7
      %v730 = vsub.s32 0, %v729
      %v731 = vrot.slane %v726, %v730
      %vm733 = vcmask 130048
      %v735 = vsel %vm733, %v723, 0
      %737 = vmatprep.subr.mxu0 0.0
      %v738 = vand.u32 %v724, 4294901760
      %739 = vmatpush1.msra.mxu0 %v738
      %740 = vmatprep.subr.mxu0 0.0
      %v741 = vand.u32 %v725, 4294901760
      %742 = vmatpush1.msra.mxu0 %v741
      %743 = vmatprep.subr.mxu0 0.0
      %744 = vmatpush1.msra.mxu0 0.0
      %745 = vmatprep.subr.mxu0 0.0
      %746 = vmatpush1.msra.mxu0 0.0
      %747 = vmatprep.subr.mxu0 0.0
      %748 = vmatpush1.msra.mxu0 0.0
      %749 = vmatprep.subr.mxu0 0.0
      %750 = vmatpush1.msra.mxu0 0.0
      %751 = vmatprep.subr.mxu0 0.0
      %752 = vmatpush1.msra.mxu0 0.0
      %753 = vmatprep.subr.mxu0 0.0
      %754 = vmatpush1.msra.mxu0 0.0
      %755 = vmatprep.subr.mxu0 0.0
      %756 = vmatpush1.msra.mxu0 0.0
      %757 = vmatprep.subr.mxu0 0.0
      %758 = vmatpush1.msra.mxu0 0.0
      %759 = vmatprep.subr.mxu0 0.0
      %760 = vmatpush1.msra.mxu0 0.0
      %761 = vmatprep.subr.mxu0 0.0
      %762 = vmatpush1.msra.mxu0 0.0
      %763 = vmatprep.subr.mxu0 0.0
      %764 = vmatpush1.msra.mxu0 0.0
      %765 = vmatprep.subr.mxu0 0.0
      %766 = vmatpush1.msra.mxu0 0.0
      %767 = vmatprep.subr.mxu0 0.0
      %768 = vmatpush1.msra.mxu0 0.0
      %769 = vmatprep.subr.mxu0 0.0
      %770 = vmatpush1.msra.mxu0 0.0
      %771 = vmatprep.subr.mxu0 0.0
      %772 = vmatpush1.msra.mxu0 0.0
      %773 = vmatprep.subr.mxu0 0.0
      %774 = vmatpush1.msra.mxu0 0.0
      %775 = vmatprep.subr.mxu0 0.0
      %776 = vmatpush1.msra.mxu0 0.0
      %777 = vmatprep.subr.mxu0 0.0
      %778 = vmatpush1.msra.mxu0 0.0
      %779 = vmatprep.subr.mxu0 0.0
      %780 = vmatpush1.msra.mxu0 0.0
      %781 = vmatprep.subr.mxu0 0.0
      %782 = vmatpush1.msra.mxu0 0.0
      %783 = vmatprep.subr.mxu0 0.0
      %784 = vmatpush1.msra.mxu0 0.0
      %785 = vmatprep.subr.mxu0 0.0
      %786 = vmatpush1.msra.mxu0 0.0
      %787 = vmatprep.subr.mxu0 0.0
      %788 = vmatpush1.msra.mxu0 0.0
      %789 = vmatprep.subr.mxu0 0.0
      %790 = vmatpush1.msra.mxu0 0.0
      %791 = vmatprep.subr.mxu0 0.0
      %792 = vmatpush1.msra.mxu0 0.0
      %793 = vmatprep.subr.mxu0 0.0
      %794 = vmatpush1.msra.mxu0 0.0
      %795 = vmatprep.subr.mxu0 0.0
      %796 = vmatpush1.msra.mxu0 0.0
      %797 = vmatprep.subr.mxu0 0.0
      %798 = vmatpush1.msra.mxu0 0.0
      %799 = vmatprep.subr.mxu0 0.0
      %800 = vmatpush1.msra.mxu0 0.0
      %801 = vmatprep.subr.mxu0 0.0
      %802 = vmatpush1.msra.mxu0 0.0
      %803 = vmatprep.mubr.f32.mxu0 0.0
      %v804 = vand.u32 %v735, 4294901760
      %v805 = vsub.f32 %v735, %v804
      %v806 = vand.u32 %v805, 4294901760
      %v807 = vsub.f32 %v805, %v806
      %v808 = vand.u32 %v807, 4294901760
      %809 = vmatmul.mubr.f32.gmra.mrb[0].mxu0 %v808
      %v810 = vpop.f32.mrb[0].mxu0
      %v811 = vadd.f32 %v731, %v810
      %v812 = vpop.f32.mrb[0].mxu0
      %813 = vdwg.mxu0
      %814 = vmatprep.subr.mxu0 0.0
      %v815 = vand.u32 %v724, 4294901760
      %v816 = vsub.f32 %v724, %v815
      %v817 = vand.u32 %v816, 4294901760
      %v818 = vsub.f32 %v816, %v817
      %v819 = vand.u32 %v818, 4294901760
      %820 = vmatpush1.msra.mxu0 %v819
      %821 = vmatprep.subr.mxu0 0.0
      %v822 = vand.u32 %v725, 4294901760
      %v823 = vsub.f32 %v725, %v822
      %v824 = vand.u32 %v823, 4294901760
      %v825 = vsub.f32 %v823, %v824
      %v826 = vand.u32 %v825, 4294901760
      %827 = vmatpush1.msra.mxu0 %v826
      %828 = vmatprep.subr.mxu0 0.0
      %829 = vmatpush1.msra.mxu0 0.0
      %830 = vmatprep.subr.mxu0 0.0
      %831 = vmatpush1.msra.mxu0 0.0
      %832 = vmatprep.subr.mxu0 0.0
      %833 = vmatpush1.msra.mxu0 0.0
      %834 = vmatprep.subr.mxu0 0.0
      %835 = vmatpush1.msra.mxu0 0.0
      %836 = vmatprep.subr.mxu0 0.0
      %837 = vmatpush1.msra.mxu0 0.0
      %838 = vmatprep.subr.mxu0 0.0
      %839 = vmatpush1.msra.mxu0 0.0
      %840 = vmatprep.subr.mxu0 0.0
      %841 = vmatpush1.msra.mxu0 0.0
      %842 = vmatprep.subr.mxu0 0.0
      %843 = vmatpush1.msra.mxu0 0.0
      %844 = vmatprep.subr.mxu0 0.0
      %845 = vmatpush1.msra.mxu0 0.0
      %846 = vmatprep.subr.mxu0 0.0
      %847 = vmatpush1.msra.mxu0 0.0
      %848 = vmatprep.subr.mxu0 0.0
      %849 = vmatpush1.msra.mxu0 0.0
      %850 = vmatprep.subr.mxu0 0.0
      %851 = vmatpush1.msra.mxu0 0.0
      %852 = vmatprep.subr.mxu0 0.0
      %853 = vmatpush1.msra.mxu0 0.0
      %854 = vmatprep.subr.mxu0 0.0
      %855 = vmatpush1.msra.mxu0 0.0
      %856 = vmatprep.subr.mxu0 0.0
      %857 = vmatpush1.msra.mxu0 0.0
      %858 = vmatprep.subr.mxu0 0.0
      %859 = vmatpush1.msra.mxu0 0.0
      %860 = vmatprep.subr.mxu0 0.0
      %861 = vmatpush1.msra.mxu0 0.0
      %862 = vmatprep.subr.mxu0 0.0
      %863 = vmatpush1.msra.mxu0 0.0
      %864 = vmatprep.subr.mxu0 0.0
      %865 = vmatpush1.msra.mxu0 0.0
      %866 = vmatprep.subr.mxu0 0.0
      %867 = vmatpush1.msra.mxu0 0.0
      %868 = vmatprep.subr.mxu0 0.0
      %869 = vmatpush1.msra.mxu0 0.0
      %870 = vmatprep.subr.mxu0 0.0
      %871 = vmatpush1.msra.mxu0 0.0
      %872 = vmatprep.subr.mxu0 0.0
      %873 = vmatpush1.msra.mxu0 0.0
      %874 = vmatprep.subr.mxu0 0.0
      %875 = vmatpush1.msra.mxu0 0.0
      %876 = vmatprep.subr.mxu0 0.0
      %877 = vmatpush1.msra.mxu0 0.0
      %878 = vmatprep.subr.mxu0 0.0
      %879 = vmatpush1.msra.mxu0 0.0
      %880 = vmatprep.subr.mxu0 0.0
      %881 = vmatpush1.msra.mxu0 0.0
      %882 = vmatprep.subr.mxu0 0.0
      %883 = vmatpush1.msra.mxu0 0.0
      %884 = vmatprep.subr.mxu0 0.0
      %885 = vmatpush1.msra.mxu0 0.0
      %886 = vmatprep.subr.mxu0 0.0
      %887 = vmatpush1.msra.mxu0 0.0
      %888 = vmatprep.mubr.f32.mxu0 0.0
      %v889 = vand.u32 %v735, 4294901760
      %890 = vmatmul.mubr.f32.gmra.mrb[0].mxu0 %v889
      %v891 = vpop.f32.mrb[0].mxu0
      %v892 = vadd.f32 %v811, %v891
      %v893 = vpop.f32.mrb[0].mxu0
      %894 = vdwg.mxu0
      %895 = vmatprep.subr.mxu0 0.0
      %v896 = vand.u32 %v724, 4294901760
      %v897 = vsub.f32 %v724, %v896
      %898 = vmatpush1.msra.mxu0 %v897
      %899 = vmatprep.subr.mxu0 0.0
      %v900 = vand.u32 %v725, 4294901760
      %v901 = vsub.f32 %v725, %v900
      %902 = vmatpush1.msra.mxu0 %v901
      %903 = vmatprep.subr.mxu0 0.0
      %904 = vmatpush1.msra.mxu0 0.0
      %905 = vmatprep.subr.mxu0 0.0
      %906 = vmatpush1.msra.mxu0 0.0
      %907 = vmatprep.subr.mxu0 0.0
      %908 = vmatpush1.msra.mxu0 0.0
      %909 = vmatprep.subr.mxu0 0.0
      %910 = vmatpush1.msra.mxu0 0.0
      %911 = vmatprep.subr.mxu0 0.0
      %912 = vmatpush1.msra.mxu0 0.0
      %913 = vmatprep.subr.mxu0 0.0
      %914 = vmatpush1.msra.mxu0 0.0
      %915 = vmatprep.subr.mxu0 0.0
      %916 = vmatpush1.msra.mxu0 0.0
      %917 = vmatprep.subr.mxu0 0.0
      %918 = vmatpush1.msra.mxu0 0.0
      %919 = vmatprep.subr.mxu0 0.0
      %920 = vmatpush1.msra.mxu0 0.0
      %921 = vmatprep.subr.mxu0 0.0
      %922 = vmatpush1.msra.mxu0 0.0
      %923 = vmatprep.subr.mxu0 0.0
      %924 = vmatpush1.msra.mxu0 0.0
      %925 = vmatprep.subr.mxu0 0.0
      %926 = vmatpush1.msra.mxu0 0.0
      %927 = vmatprep.subr.mxu0 0.0
      %928 = vmatpush1.msra.mxu0 0.0
      %929 = vmatprep.subr.mxu0 0.0
      %930 = vmatpush1.msra.mxu0 0.0
      %931 = vmatprep.subr.mxu0 0.0
      %932 = vmatpush1.msra.mxu0 0.0
      %933 = vmatprep.subr.mxu0 0.0
      %934 = vmatpush1.msra.mxu0 0.0
      %935 = vmatprep.subr.mxu0 0.0
      %936 = vmatpush1.msra.mxu0 0.0
      %937 = vmatprep.subr.mxu0 0.0
      %938 = vmatpush1.msra.mxu0 0.0
      %939 = vmatprep.subr.mxu0 0.0
      %940 = vmatpush1.msra.mxu0 0.0
      %941 = vmatprep.subr.mxu0 0.0
      %942 = vmatpush1.msra.mxu0 0.0
      %943 = vmatprep.subr.mxu0 0.0
      %944 = vmatpush1.msra.mxu0 0.0
      %945 = vmatprep.subr.mxu0 0.0
      %946 = vmatpush1.msra.mxu0 0.0
      %947 = vmatprep.subr.mxu0 0.0
      %948 = vmatpush1.msra.mxu0 0.0
      %949 = vmatprep.subr.mxu0 0.0
      %950 = vmatpush1.msra.mxu0 0.0
      %951 = vmatprep.subr.mxu0 0.0
      %952 = vmatpush1.msra.mxu0 0.0
      %953 = vmatprep.subr.mxu0 0.0
      %954 = vmatpush1.msra.mxu0 0.0
      %955 = vmatprep.subr.mxu0 0.0
      %956 = vmatpush1.msra.mxu0 0.0
      %957 = vmatprep.subr.mxu0 0.0
      %958 = vmatpush1.msra.mxu0 0.0
      %959 = vmatprep.subr.mxu0 0.0
      %960 = vmatpush1.msra.mxu0 0.0
      %961 = vmatprep.subr.mxu0 0.0
      %962 = vmatpush1.msra.mxu0 0.0
      %963 = vmatprep.mubr.f32.mxu0 0.0
      %v964 = vand.u32 %v735, 4294901760
      %v965 = vsub.f32 %v735, %v964
      %966 = vmatmul.mubr.f32.gmra.mrb[0].mxu0 %v965
      %v967 = vpop.f32.mrb[0].mxu0
      %v968 = vadd.f32 %v892, %v967
      %v969 = vpop.f32.mrb[0].mxu0
      %970 = vdwg.mxu0
      %971 = vmatprep.subr.mxu0 0.0
      %v972 = vand.u32 %v724, 4294901760
      %973 = vmatpush1.msra.mxu0 %v972
      %974 = vmatprep.subr.mxu0 0.0
      %v975 = vand.u32 %v725, 4294901760
      %976 = vmatpush1.msra.mxu0 %v975
      %977 = vmatprep.subr.mxu0 0.0
      %978 = vmatpush1.msra.mxu0 0.0
      %979 = vmatprep.subr.mxu0 0.0
      %980 = vmatpush1.msra.mxu0 0.0
      %981 = vmatprep.subr.mxu0 0.0
      %982 = vmatpush1.msra.mxu0 0.0
      %983 = vmatprep.subr.mxu0 0.0
      %984 = vmatpush1.msra.mxu0 0.0
      %985 = vmatprep.subr.mxu0 0.0
      %986 = vmatpush1.msra.mxu0 0.0
      %987 = vmatprep.subr.mxu0 0.0
      %988 = vmatpush1.msra.mxu0 0.0
      %989 = vmatprep.subr.mxu0 0.0
      %990 = vmatpush1.msra.mxu0 0.0
      %991 = vmatprep.subr.mxu0 0.0
      %992 = vmatpush1.msra.mxu0 0.0
      %993 = vmatprep.subr.mxu0 0.0
      %994 = vmatpush1.msra.mxu0 0.0
      %995 = vmatprep.subr.mxu0 0.0
      %996 = vmatpush1.msra.mxu0 0.0
      %997 = vmatprep.subr.mxu0 0.0
      %998 = vmatpush1.msra.mxu0 0.0
      %999 = vmatprep.subr.mxu0 0.0
      %1000 = vmatpush1.msra.mxu0 0.0
      %1001 = vmatprep.subr.mxu0 0.0
      %1002 = vmatpush1.msra.mxu0 0.0
      %1003 = vmatprep.subr.mxu0 0.0
      %1004 = vmatpush1.msra.mxu0 0.0
      %1005 = vmatprep.subr.mxu0 0.0
      %1006 = vmatpush1.msra.mxu0 0.0
      %1007 = vmatprep.subr.mxu0 0.0
      %1008 = vmatpush1.msra.mxu0 0.0
      %1009 = vmatprep.subr.mxu0 0.0
      %1010 = vmatpush1.msra.mxu0 0.0
      %1011 = vmatprep.subr.mxu0 0.0
      %1012 = vmatpush1.msra.mxu0 0.0
      %1013 = vmatprep.subr.mxu0 0.0
      %1014 = vmatpush1.msra.mxu0 0.0
      %1015 = vmatprep.subr.mxu0 0.0
      %1016 = vmatpush1.msra.mxu0 0.0
      %1017 = vmatprep.subr.mxu0 0.0
      %1018 = vmatpush1.msra.mxu0 0.0
      %1019 = vmatprep.subr.mxu0 0.0
      %1020 = vmatpush1.msra.mxu0 0.0
      %1021 = vmatprep.subr.mxu0 0.0
      %1022 = vmatpush1.msra.mxu0 0.0
      %1023 = vmatprep.subr.mxu0 0.0
      %1024 = vmatpush1.msra.mxu0 0.0
      %1025 = vmatprep.subr.mxu0 0.0
      %1026 = vmatpush1.msra.mxu0 0.0
      %1027 = vmatprep.subr.mxu0 0.0
      %1028 = vmatpush1.msra.mxu0 0.0
      %1029 = vmatprep.subr.mxu0 0.0
      %1030 = vmatpush1.msra.mxu0 0.0
      %1031 = vmatprep.subr.mxu0 0.0
      %1032 = vmatpush1.msra.mxu0 0.0
      %1033 = vmatprep.subr.mxu0 0.0
      %1034 = vmatpush1.msra.mxu0 0.0
      %1035 = vmatprep.subr.mxu0 0.0
      %1036 = vmatpush1.msra.mxu0 0.0
      %1037 = vmatprep.mubr.f32.mxu0 0.0
      %v1038 = vand.u32 %v735, 4294901760
      %v1039 = vsub.f32 %v735, %v1038
      %v1040 = vand.u32 %v1039, 4294901760
      %1041 = vmatmul.mubr.f32.gmra.mrb[0].mxu0 %v1040
      %v1042 = vpop.f32.mrb[0].mxu0
      %v1043 = vadd.f32 %v968, %v1042
      %v1044 = vpop.f32.mrb[0].mxu0
      %1045 = vdwg.mxu0
      %1046 = vmatprep.subr.mxu0 0.0
      %v1047 = vand.u32 %v724, 4294901760
      %v1048 = vsub.f32 %v724, %v1047
      %v1049 = vand.u32 %v1048, 4294901760
      %1050 = vmatpush1.msra.mxu0 %v1049
      %1051 = vmatprep.subr.mxu0 0.0
      %v1052 = vand.u32 %v725, 4294901760
      %v1053 = vsub.f32 %v725, %v1052
      %v1054 = vand.u32 %v1053, 4294901760
      %1055 = vmatpush1.msra.mxu0 %v1054
      %1056 = vmatprep.subr.mxu0 0.0
      %1057 = vmatpush1.msra.mxu0 0.0
      %1058 = vmatprep.subr.mxu0 0.0
      %1059 = vmatpush1.msra.mxu0 0.0
      %1060 = vmatprep.subr.mxu0 0.0
      %1061 = vmatpush1.msra.mxu0 0.0
      %1062 = vmatprep.subr.mxu0 0.0
      %1063 = vmatpush1.msra.mxu0 0.0
      %1064 = vmatprep.subr.mxu0 0.0
      %1065 = vmatpush1.msra.mxu0 0.0
      %1066 = vmatprep.subr.mxu0 0.0
      %1067 = vmatpush1.msra.mxu0 0.0
      %1068 = vmatprep.subr.mxu0 0.0
      %1069 = vmatpush1.msra.mxu0 0.0
      %1070 = vmatprep.subr.mxu0 0.0
      %1071 = vmatpush1.msra.mxu0 0.0
      %1072 = vmatprep.subr.mxu0 0.0
      %1073 = vmatpush1.msra.mxu0 0.0
      %1074 = vmatprep.subr.mxu0 0.0
      %1075 = vmatpush1.msra.mxu0 0.0
      %1076 = vmatprep.subr.mxu0 0.0
      %1077 = vmatpush1.msra.mxu0 0.0
      %1078 = vmatprep.subr.mxu0 0.0
      %1079 = vmatpush1.msra.mxu0 0.0
      %1080 = vmatprep.subr.mxu0 0.0
      %1081 = vmatpush1.msra.mxu0 0.0
      %1082 = vmatprep.subr.mxu0 0.0
      %1083 = vmatpush1.msra.mxu0 0.0
      %1084 = vmatprep.subr.mxu0 0.0
      %1085 = vmatpush1.msra.mxu0 0.0
      %1086 = vmatprep.subr.mxu0 0.0
      %1087 = vmatpush1.msra.mxu0 0.0
      %1088 = vmatprep.subr.mxu0 0.0
      %1089 = vmatpush1.msra.mxu0 0.0
      %1090 = vmatprep.subr.mxu0 0.0
      %1091 = vmatpush1.msra.mxu0 0.0
      %1092 = vmatprep.subr.mxu0 0.0
      %1093 = vmatpush1.msra.mxu0 0.0
      %1094 = vmatprep.subr.mxu0 0.0
      %1095 = vmatpush1.msra.mxu0 0.0
      %1096 = vmatprep.subr.mxu0 0.0
      %1097 = vmatpush1.msra.mxu0 0.0
      %1098 = vmatprep.subr.mxu0 0.0
      %1099 = vmatpush1.msra.mxu0 0.0
      %1100 = vmatprep.subr.mxu0 0.0
      %1101 = vmatpush1.msra.mxu0 0.0
      %1102 = vmatprep.subr.mxu0 0.0
      %1103 = vmatpush1.msra.mxu0 0.0
      %1104 = vmatprep.subr.mxu0 0.0
      %1105 = vmatpush1.msra.mxu0 0.0
      %1106 = vmatprep.subr.mxu0 0.0
      %1107 = vmatpush1.msra.mxu0 0.0
      %1108 = vmatprep.subr.mxu0 0.0
      %1109 = vmatpush1.msra.mxu0 0.0
      %1110 = vmatprep.subr.mxu0 0.0
      %1111 = vmatpush1.msra.mxu0 0.0
      %1112 = vmatprep.subr.mxu0 0.0
      %1113 = vmatpush1.msra.mxu0 0.0
      %1114 = vmatprep.subr.mxu0 0.0
      %1115 = vmatpush1.msra.mxu0 0.0
      %1116 = vmatprep.mubr.f32.mxu0 0.0
      %v1117 = vand.u32 %v735, 4294901760
      %1118 = vmatmul.mubr.f32.gmra.mrb[0].mxu0 %v1117
      %v1119 = vpop.f32.mrb[0].mxu0
      %v1120 = vadd.f32 %v1043, %v1119
      %v1121 = vpop.f32.mrb[0].mxu0
      %1122 = vdwg.mxu0
      %1123 = vmatprep.subr.mxu0 0.0
      %v1124 = vand.u32 %v724, 4294901760
      %1125 = vmatpush1.msra.mxu0 %v1124
      %1126 = vmatprep.subr.mxu0 0.0
      %v1127 = vand.u32 %v725, 4294901760
      %1128 = vmatpush1.msra.mxu0 %v1127
      %1129 = vmatprep.subr.mxu0 0.0
      %1130 = vmatpush1.msra.mxu0 0.0
      %1131 = vmatprep.subr.mxu0 0.0
      %1132 = vmatpush1.msra.mxu0 0.0
      %1133 = vmatprep.subr.mxu0 0.0
      %1134 = vmatpush1.msra.mxu0 0.0
      %1135 = vmatprep.subr.mxu0 0.0
      %1136 = vmatpush1.msra.mxu0 0.0
      %1137 = vmatprep.subr.mxu0 0.0
      %1138 = vmatpush1.msra.mxu0 0.0
      %1139 = vmatprep.subr.mxu0 0.0
      %1140 = vmatpush1.msra.mxu0 0.0
      %1141 = vmatprep.subr.mxu0 0.0
      %1142 = vmatpush1.msra.mxu0 0.0
      %1143 = vmatprep.subr.mxu0 0.0
      %1144 = vmatpush1.msra.mxu0 0.0
      %1145 = vmatprep.subr.mxu0 0.0
      %1146 = vmatpush1.msra.mxu0 0.0
      %1147 = vmatprep.subr.mxu0 0.0
      %1148 = vmatpush1.msra.mxu0 0.0
      %1149 = vmatprep.subr.mxu0 0.0
      %1150 = vmatpush1.msra.mxu0 0.0
      %1151 = vmatprep.subr.mxu0 0.0
      %1152 = vmatpush1.msra.mxu0 0.0
      %1153 = vmatprep.subr.mxu0 0.0
      %1154 = vmatpush1.msra.mxu0 0.0
      %1155 = vmatprep.subr.mxu0 0.0
      %1156 = vmatpush1.msra.mxu0 0.0
      %1157 = vmatprep.subr.mxu0 0.0
      %1158 = vmatpush1.msra.mxu0 0.0
      %1159 = vmatprep.subr.mxu0 0.0
      %1160 = vmatpush1.msra.mxu0 0.0
      %1161 = vmatprep.subr.mxu0 0.0
      %1162 = vmatpush1.msra.mxu0 0.0
      %1163 = vmatprep.subr.mxu0 0.0
      %1164 = vmatpush1.msra.mxu0 0.0
      %1165 = vmatprep.subr.mxu0 0.0
      %1166 = vmatpush1.msra.mxu0 0.0
      %1167 = vmatprep.subr.mxu0 0.0
      %1168 = vmatpush1.msra.mxu0 0.0
      %1169 = vmatprep.subr.mxu0 0.0
      %1170 = vmatpush1.msra.mxu0 0.0
      %1171 = vmatprep.subr.mxu0 0.0
      %1172 = vmatpush1.msra.mxu0 0.0
      %1173 = vmatprep.subr.mxu0 0.0
      %1174 = vmatpush1.msra.mxu0 0.0
      %1175 = vmatprep.subr.mxu0 0.0
      %1176 = vmatpush1.msra.mxu0 0.0
      %1177 = vmatprep.subr.mxu0 0.0
      %1178 = vmatpush1.msra.mxu0 0.0
      %1179 = vmatprep.subr.mxu0 0.0
      %1180 = vmatpush1.msra.mxu0 0.0
      %1181 = vmatprep.subr.mxu0 0.0
      %1182 = vmatpush1.msra.mxu0 0.0
      %1183 = vmatprep.subr.mxu0 0.0
      %1184 = vmatpush1.msra.mxu0 0.0
      %1185 = vmatprep.subr.mxu0 0.0
      %1186 = vmatpush1.msra.mxu0 0.0
      %1187 = vmatprep.subr.mxu0 0.0
      %1188 = vmatpush1.msra.mxu0 0.0
      %1189 = vmatprep.mubr.f32.mxu0 0.0
      %v1190 = vand.u32 %v735, 4294901760
      %1191 = vmatmul.mubr.f32.gmra.mrb[0].mxu0 %v1190
      %v1192 = vpop.f32.mrb[0].mxu0
      %v1193 = vadd.f32 %v1120, %v1192
      %v1194 = vpop.f32.mrb[0].mxu0
      %1195 = vdwg.mxu0
      %1196 = vst [vmem:[%s219] sm:$0xff] %v1193
      %p1197 = scmp.lt.s32.totalorder %s16, 1
      %s1198 = scalar_select %p1197, %s16, 1
      %s1199 = smul.addr %s1198, 8
      %s1200 = scalar_lea.vmem %s5, %s1199
      // Predicated region
      $region41: #{encoder_forward.1} parent=39 // pred_check
        %p1201 = pneg %p144
      $region42: #{encoder_forward.1} parent=39 // pred_check_branch
        %1203 = sbr.rel (%p1201) target = $region44
      $region43: #{encoder_forward.1} parent=39 // pred_region
        _
      $region44: #{encoder_forward.1} parent=39 // pred_fallthru
        _
    $region40: #{encoder_forward.1} parent=5 // pred_fallthru
      _
    %p1204 = scmp.le.s32.totalorder 2, %s11
    // Predicated region
    $region45: #{encoder_forward.1} parent=5 // pred_check
      %p1205 = pneg %p1204
    $region46: #{encoder_forward.1} parent=5 // pred_check_branch
      %1207 = sbr.rel (%p1205) target = $region48
    $region47: #{encoder_forward.1} parent=5 // pred_region
      %s1208 = ssub.s32 %s11, 2
      // Predicated region
      $region49: #{encoder_forward.1} parent=47 // pred_check
        %p1209 = pneg %p150
      $region50: #{encoder_forward.1} parent=47 // pred_check_branch
        %1211 = sbr.rel (%p1209) target = $region52
      $region51: #{encoder_forward.1} parent=47 // pred_region
        %p1212 = scmp.lt.s32.totalorder %s17, 1
        %s1213 = scalar_select %p1212, %s17, 1
        %s1214 = smul.addr %s1213, 8
        %s1215 = scalar_lea.vmem %s5, %s1214
      $region52: #{encoder_forward.1} parent=47 // pred_fallthru
        _
    $region48: #{encoder_forward.1} parent=5 // pred_fallthru
      _
  $region6: #{encoder_forward.1} parent=0 // loop_footer
    %s15 = sadd.s32 1, %s11
  $region7: #{encoder_forward.1} parent=0 // loop_footer_branch
    %10 = sbr.rel target = $region3
  $region8: #{encoder_forward.1} parent=0 // loop_exit
    _

</llo_original>
